<compile_context>
chip_gen: v7x
topology: tpu7x:2x2x1
jax: 0.10.0
libtpu: 0.0.40
codegen_flags: <defaults>
</compile_context>

<pallas_src>
import math
import jax
import jax.numpy as jnp
from jax.experimental import pallas as pl
from jax.experimental.pallas import tpu as pltpu

LN_EPS = 1e-5  # PyTorch nn.LayerNorm default


def _round_up(x, m):
    return (x + m - 1) // m * m


def _classifier_kernel(comb_ref, w1_ref, b1_ref, g_ref, beta_ref,
                       w2_ref, b2_ref, gate_ref, out_ref):
    # Linear 1: [tB, C_pad] @ [C_pad, 512] + b1  (f32 accumulation on MXU)
    h = jnp.dot(comb_ref[...], w1_ref[...],
                preferred_element_type=jnp.float32) + b1_ref[...]

    # LayerNorm over the (unpadded) 512-wide hidden axis, in f32 on the VPU.
    mean = jnp.mean(h, axis=-1, keepdims=True)
    centered = h - mean
    var = jnp.mean(centered * centered, axis=-1, keepdims=True)
    hn = centered * jax.lax.rsqrt(var + LN_EPS)
    hn = hn * g_ref[...] + beta_ref[...]

    # Exact (erf-based) GELU, matching torch.nn.GELU() default.
    gelu = 0.5 * hn * (1.0 + jax.lax.erf(hn * (1.0 / math.sqrt(2.0))))

    # Linear 2: [tB, 512] @ [512, L_pad] + b2 (lane-dense output slab).
    logits = jnp.dot(gelu.astype(w2_ref.dtype), w2_ref[...],
                     preferred_element_type=jnp.float32) + b2_ref[...]

    # Language-dependent gating (sigmoid precomputed in the wrapper).
    out_ref[...] = logits * gate_ref[...]


def language_aware_classifier_forward(x, lang_ids, params, *,
                                      block_b=512, use_bf16=False):
    """x: [B, H] float32, lang_ids: [B] int32, params: dict of weights."""
    # ---- glue: gathers + concat + padding (plain JAX) ----
    lang_emb = params["lang_embed"][lang_ids]             # [B, 64]
    combined = jnp.concatenate([x, lang_emb], axis=-1)    # [B, C]

    # Precompute sigmoid once on the small [7, L] parameter table, then gather.
    gate_table = jax.nn.sigmoid(params["lang_thresholds"])  # [7, L]
    gate = gate_table[lang_ids]                              # [B, L]

    B, C = combined.shape
    MID = params["w1"].shape[1]                            # 512
    L = params["w2"].shape[1]

    # Lane/sublane-friendly padded sizes.
    C_pad = _round_up(C, 128)
    L_pad = _round_up(L, 128)
    tB = min(block_b, _round_up(B, 8))                     # rows per grid step
    B_pad = _round_up(B, tB)
    num_blocks = B_pad // tB

    in_dtype = jnp.bfloat16 if use_bf16 else jnp.float32

    comb_p = jnp.zeros((B_pad, C_pad), in_dtype).at[:B, :C].set(
        combined.astype(in_dtype))
    w1_p = jnp.zeros((C_pad, MID), in_dtype).at[:C, :].set(
        params["w1"].astype(in_dtype))
    w2_p = jnp.zeros((MID, L_pad), in_dtype).at[:, :L].set(
        params["w2"].astype(in_dtype))
    b2_p = jnp.zeros((1, L_pad), jnp.float32).at[0, :L].set(params["b2"])
    gate_p = jnp.zeros((B_pad, L_pad), jnp.float32).at[:B, :L].set(gate)

    b1 = params["b1"].reshape(1, MID).astype(jnp.float32)
    gamma = params["ln_gamma"].reshape(1, MID).astype(jnp.float32)
    beta = params["ln_beta"].reshape(1, MID).astype(jnp.float32)

    batch_spec = lambda cols: pl.BlockSpec((tB, cols), lambda i: (i, 0))
    resident = lambda shape: pl.BlockSpec(shape, lambda i: (0, 0))

    out = pl.pallas_call(
        _classifier_kernel,
        out_shape=jax.ShapeDtypeStruct((B_pad, L_pad), jnp.float32),
        grid=(num_blocks,),
        in_specs=[
            batch_spec(C_pad),            # combined   [tB, C_pad]
            resident((C_pad, MID)),       # W1         (VMEM-resident)
            resident((1, MID)),           # b1
            resident((1, MID)),           # ln gamma
            resident((1, MID)),           # ln beta
            resident((MID, L_pad)),       # W2
            resident((1, L_pad)),         # b2
            batch_spec(L_pad),            # gate       [tB, L_pad]
        ],
        out_specs=batch_spec(L_pad),      # lane-dense output slab
        compiler_params=pltpu.CompilerParams(
            dimension_semantics=("parallel",)),
    )(comb_p, w1_p, b1, gamma, beta, w2_p, b2_p, gate_p)

    return out[:B, :L]


def init_params(key, hidden_size=32, num_labels=6):
    """Deterministic init mirroring the PyTorch module's __init__."""
    k_emb, k_w1, k_w2, k_thr = jax.random.split(key, 4)
    c_in = hidden_size + 64
    mid = 512

    def xavier_uniform(k, fan_in, fan_out):
        bound = math.sqrt(6.0 / (fan_in + fan_out))
        return jax.random.uniform(k, (fan_in, fan_out), jnp.float32,
                                  minval=-bound, maxval=bound)

    return {
        # nn.Embedding default init: N(0, 1)
        "lang_embed": jax.random.normal(k_emb, (7, 64), jnp.float32),
        # Linear(hidden+64, 512), Xavier uniform, zero bias
        "w1": xavier_uniform(k_w1, c_in, mid),
        "b1": jnp.zeros((mid,), jnp.float32),
        # LayerNorm(512): weight=1, bias=0
        "ln_gamma": jnp.ones((mid,), jnp.float32),
        "ln_beta": jnp.zeros((mid,), jnp.float32),
        # Linear(512, num_labels), Xavier uniform, zero bias
        "w2": xavier_uniform(k_w2, mid, num_labels),
        "b2": jnp.zeros((num_labels,), jnp.float32),
        # lang_thresholds ~ N(1.0, 0.01)
        "lang_thresholds": 1.0 + 0.01 * jax.random.normal(
            k_thr, (7, num_labels), jnp.float32),
    }


def _reference_forward(x, lang_ids, params):
    """Pure-JAX reference for correctness check."""
    lang_emb = params["lang_embed"][lang_ids]
    combined = jnp.concatenate([x, lang_emb], axis=-1)
    h = combined @ params["w1"] + params["b1"]
    mean = jnp.mean(h, axis=-1, keepdims=True)
    var = jnp.mean((h - mean) ** 2, axis=-1, keepdims=True)
    hn = (h - mean) / jnp.sqrt(var + LN_EPS)
    hn = hn * params["ln_gamma"] + params["ln_beta"]
    gelu = 0.5 * hn * (1.0 + jax.lax.erf(hn / math.sqrt(2.0)))
    logits = gelu @ params["w2"] + params["b2"]
    thr = params["lang_thresholds"][lang_ids]
    return logits * jax.nn.sigmoid(thr)


if __name__ == "__main__":
    key = jax.random.PRNGKey(0)
    k_params, k_x, k_lang = jax.random.split(key, 3)

    B, H, L = 8, 32, 6
    params = init_params(k_params, hidden_size=H, num_labels=L)
    x = jax.random.normal(k_x, (B, H), jnp.float32)
    lang_ids = jax.random.randint(k_lang, (B,), 0, 7, dtype=jnp.int32)

    out = language_aware_classifier_forward(x, lang_ids, params)
    out = jax.block_until_ready(out)

    ref = _reference_forward(x, lang_ids, params)
    assert out.shape == (B, L)
    assert jnp.allclose(out, ref, atol=1e-4, rtol=1e-4)

    print("KERNEL_OK")
</pallas_src>

<mosaic_0001>
module attributes {stable_mosaic.version = 11 : i64} {
  func.func @_classifier_kernel(%arg0: i32, %arg1: memref<8x128xf32, #tpu.memory_space<vmem>>, %arg2: memref<128x512xf32, #tpu.memory_space<vmem>>, %arg3: memref<1x512xf32, #tpu.memory_space<vmem>>, %arg4: memref<1x512xf32, #tpu.memory_space<vmem>>, %arg5: memref<1x512xf32, #tpu.memory_space<vmem>>, %arg6: memref<512x128xf32, #tpu.memory_space<vmem>>, %arg7: memref<1x128xf32, #tpu.memory_space<vmem>>, %arg8: memref<8x128xf32, #tpu.memory_space<vmem>>, %arg9: memref<8x128xf32, #tpu.memory_space<vmem>>) attributes {dimension_semantics = [#tpu.dimension_semantics<parallel>], iteration_bounds = array<i64: 1>, scalar_prefetch = 0 : i64, scratch_operands = 0 : i64, tpu.core_type = #tpu.core_type<tc>, window_params = [{transform_indices = @transform_0, window_bounds = array<i64: 8, 128>}, {pipeline_mode = #tpu.pipeline_mode<synchronous>, transform_indices = @transform_1, window_bounds = array<i64: 128, 512>}, {pipeline_mode = #tpu.pipeline_mode<synchronous>, transform_indices = @transform_2, window_bounds = array<i64: 1, 512>}, {pipeline_mode = #tpu.pipeline_mode<synchronous>, transform_indices = @transform_3, window_bounds = array<i64: 1, 512>}, {pipeline_mode = #tpu.pipeline_mode<synchronous>, transform_indices = @transform_4, window_bounds = array<i64: 1, 512>}, {pipeline_mode = #tpu.pipeline_mode<synchronous>, transform_indices = @transform_5, window_bounds = array<i64: 512, 128>}, {pipeline_mode = #tpu.pipeline_mode<synchronous>, transform_indices = @transform_6, window_bounds = array<i64: 1, 128>}, {transform_indices = @transform_7, window_bounds = array<i64: 8, 128>}, {transform_indices = @transform_8, window_bounds = array<i64: 8, 128>}]} {
    %c0 = arith.constant 0 : index
    %c0_0 = arith.constant 0 : index
    %0 = vector.load %arg1[%c0, %c0_0] : memref<8x128xf32, #tpu.memory_space<vmem>>, vector<8x128xf32>
    %c0_1 = arith.constant 0 : index
    %c0_2 = arith.constant 0 : index
    %1 = vector.load %arg2[%c0_1, %c0_2] : memref<128x512xf32, #tpu.memory_space<vmem>>, vector<128x512xf32>
    %cst = arith.constant dense<0.000000e+00> : vector<8x512xf32>
    %2 = tpu.matmul %0, %1, %cst {dimension_numbers = #tpu.dot_dimension_numbers<[1], [0], [0], [1], [0, 0, 1, 1], [], []>} : vector<8x128xf32>, vector<128x512xf32>, vector<8x512xf32> -> vector<8x512xf32>
    %c0_3 = arith.constant 0 : index
    %c0_4 = arith.constant 0 : index
    %3 = vector.load %arg3[%c0_3, %c0_4] : memref<1x512xf32, #tpu.memory_space<vmem>>, vector<1x512xf32>
    %4 = vector.broadcast %3 : vector<1x512xf32> to vector<8x512xf32>
    %5 = arith.addf %2, %4 : vector<8x512xf32>
    %cst_5 = arith.constant dense<0.000000e+00> : vector<8xf32>
    %6 = vector.multi_reduction <add>, %5, %cst_5 [1] : vector<8x512xf32> to vector<8xf32>
    %7 = vector.shape_cast %6 : vector<8xf32> to vector<8x1xf32>
    %cst_6 = arith.constant 5.120000e+02 : f32
    %8 = vector.broadcast %cst_6 : f32 to vector<8x1xf32>
    %9 = arith.divf %7, %8 : vector<8x1xf32>
    %10 = vector.broadcast %9 : vector<8x1xf32> to vector<8x512xf32>
    %11 = arith.subf %5, %10 : vector<8x512xf32>
    %12 = arith.mulf %11, %11 : vector<8x512xf32>
    %cst_7 = arith.constant dense<0.000000e+00> : vector<8xf32>
    %13 = vector.multi_reduction <add>, %12, %cst_7 [1] : vector<8x512xf32> to vector<8xf32>
    %14 = vector.shape_cast %13 : vector<8xf32> to vector<8x1xf32>
    %cst_8 = arith.constant 5.120000e+02 : f32
    %15 = vector.broadcast %cst_8 : f32 to vector<8x1xf32>
    %16 = arith.divf %14, %15 : vector<8x1xf32>
    %cst_9 = arith.constant 9.99999974E-6 : f32
    %17 = vector.broadcast %cst_9 : f32 to vector<8x1xf32>
    %18 = arith.addf %16, %17 : vector<8x1xf32>
    %19 = math.rsqrt %18 : vector<8x1xf32>
    %20 = vector.broadcast %19 : vector<8x1xf32> to vector<8x512xf32>
    %21 = arith.mulf %11, %20 : vector<8x512xf32>
    %c0_10 = arith.constant 0 : index
    %c0_11 = arith.constant 0 : index
    %22 = vector.load %arg4[%c0_10, %c0_11] : memref<1x512xf32, #tpu.memory_space<vmem>>, vector<1x512xf32>
    %23 = vector.broadcast %22 : vector<1x512xf32> to vector<8x512xf32>
    %24 = arith.mulf %21, %23 : vector<8x512xf32>
    %c0_12 = arith.constant 0 : index
    %c0_13 = arith.constant 0 : index
    %25 = vector.load %arg5[%c0_12, %c0_13] : memref<1x512xf32, #tpu.memory_space<vmem>>, vector<1x512xf32>
    %26 = vector.broadcast %25 : vector<1x512xf32> to vector<8x512xf32>
    %27 = arith.addf %24, %26 : vector<8x512xf32>
    %cst_14 = arith.constant 5.000000e-01 : f32
    %28 = vector.broadcast %cst_14 : f32 to vector<8x512xf32>
    %29 = arith.mulf %28, %27 : vector<8x512xf32>
    %cst_15 = arith.constant 0.707106769 : f32
    %30 = vector.broadcast %cst_15 : f32 to vector<8x512xf32>
    %31 = arith.mulf %27, %30 : vector<8x512xf32>
    %32 = math.erf %31 : vector<8x512xf32>
    %cst_16 = arith.constant 1.000000e+00 : f32
    %33 = vector.broadcast %cst_16 : f32 to vector<8x512xf32>
    %34 = arith.addf %33, %32 : vector<8x512xf32>
    %35 = arith.mulf %29, %34 : vector<8x512xf32>
    %c0_17 = arith.constant 0 : index
    %c0_18 = arith.constant 0 : index
    %36 = vector.load %arg6[%c0_17, %c0_18] : memref<512x128xf32, #tpu.memory_space<vmem>>, vector<512x128xf32>
    %cst_19 = arith.constant dense<0.000000e+00> : vector<8x128xf32>
    %37 = tpu.matmul %35, %36, %cst_19 {dimension_numbers = #tpu.dot_dimension_numbers<[1], [0], [0], [1], [0, 0, 1, 1], [], []>} : vector<8x512xf32>, vector<512x128xf32>, vector<8x128xf32> -> vector<8x128xf32>
    %c0_20 = arith.constant 0 : index
    %c0_21 = arith.constant 0 : index
    %38 = vector.load %arg7[%c0_20, %c0_21] : memref<1x128xf32, #tpu.memory_space<vmem>>, vector<1x128xf32>
    %39 = vector.broadcast %38 : vector<1x128xf32> to vector<8x128xf32>
    %40 = arith.addf %37, %39 : vector<8x128xf32>
    %c0_22 = arith.constant 0 : index
    %c0_23 = arith.constant 0 : index
    %41 = vector.load %arg8[%c0_22, %c0_23] : memref<8x128xf32, #tpu.memory_space<vmem>>, vector<8x128xf32>
    %42 = arith.mulf %40, %41 : vector<8x128xf32>
    %c0_24 = arith.constant 0 : index
    %c0_25 = arith.constant 0 : index
    %43 = vector.load %arg9[%c0_24, %c0_25] : memref<8x128xf32, #tpu.memory_space<vmem>>, vector<8x128xf32>
    tpu.vector_store %arg9[%c0_24, %c0_25], %42 {strides = array<i32>} : memref<8x128xf32, #tpu.memory_space<vmem>>, vector<8x128xf32>,
    return
  }
  func.func @transform_0(%arg0: i32) -> (i32, i32) {
    %c0_i32 = arith.constant 0 : i32
    %c0_i32_0 = arith.constant 0 : i32
    return %arg0, %c0_i32 : i32, i32
  }
  func.func @transform_1(%arg0: i32) -> (i32, i32) {
    %c0_i32 = arith.constant 0 : i32
    %c0_i32_0 = arith.constant 0 : i32
    %c0_i32_1 = arith.constant 0 : i32
    return %c0_i32, %c0_i32_0 : i32, i32
  }
  func.func @transform_2(%arg0: i32) -> (i32, i32) {
    %c0_i32 = arith.constant 0 : i32
    %c0_i32_0 = arith.constant 0 : i32
    %c0_i32_1 = arith.constant 0 : i32
    return %c0_i32, %c0_i32_0 : i32, i32
  }
  func.func @transform_3(%arg0: i32) -> (i32, i32) {
    %c0_i32 = arith.constant 0 : i32
    %c0_i32_0 = arith.constant 0 : i32
    %c0_i32_1 = arith.constant 0 : i32
    return %c0_i32, %c0_i32_0 : i32, i32
  }
  func.func @transform_4(%arg0: i32) -> (i32, i32) {
    %c0_i32 = arith.constant 0 : i32
    %c0_i32_0 = arith.constant 0 : i32
    %c0_i32_1 = arith.constant 0 : i32
    return %c0_i32, %c0_i32_0 : i32, i32
  }
  func.func @transform_5(%arg0: i32) -> (i32, i32) {
    %c0_i32 = arith.constant 0 : i32
    %c0_i32_0 = arith.constant 0 : i32
    %c0_i32_1 = arith.constant 0 : i32
    return %c0_i32, %c0_i32_0 : i32, i32
  }
  func.func @transform_6(%arg0: i32) -> (i32, i32) {
    %c0_i32 = arith.constant 0 : i32
    %c0_i32_0 = arith.constant 0 : i32
    %c0_i32_1 = arith.constant 0 : i32
    return %c0_i32, %c0_i32_0 : i32, i32
  }
  func.func @transform_7(%arg0: i32) -> (i32, i32) {
    %c0_i32 = arith.constant 0 : i32
    %c0_i32_0 = arith.constant 0 : i32
    return %arg0, %c0_i32 : i32, i32
  }
  func.func @transform_8(%arg0: i32) -> (i32, i32) {
    %c0_i32 = arith.constant 0 : i32
    %c0_i32_0 = arith.constant 0 : i32
    return %arg0, %c0_i32 : i32, i32
  }
}

</mosaic_0001>

<llo_original>
// kernel: tpu_custom_call.1
$region0: #{tpu_custom_call.1}
  #allocation0 [shape = 'u32[]', space=smem, size = 0x4, offset = 0x4, fixed_abs, tag = 'smem constant byte address 0x4 - core index']
  #allocation1 [shape = 'u32[144,128]{1,0:T(1,128)}', space=vmem, size = 0x12000, scoped, tag = 'internal scratch']
  %s0 = inlined_call_operand.hbm [shape: f32[8,128], index: 0, kind: input, shape index: {}]
  %s1 = inlined_call_operand.hbm [shape: f32[128,512], index: 1, kind: input, shape index: {}]
  %s2 = inlined_call_operand.vmem [shape: f32[1,512], index: 2, kind: input, shape index: {}]
  %s3 = inlined_call_operand.hbm [shape: f32[1,512], index: 3, kind: input, shape index: {}]
  %s4 = inlined_call_operand.hbm [shape: f32[1,512], index: 4, kind: input, shape index: {}]
  %s5 = inlined_call_operand.hbm [shape: f32[512,128], index: 5, kind: input, shape index: {}]
  %s6 = inlined_call_operand.vmem [shape: f32[1,128], index: 6, kind: input, shape index: {}]
  %s7 = inlined_call_operand.vmem [shape: f32[8,128], index: 7, kind: input, shape index: {}]
  %s8 = inlined_call_operand.hbm [shape: f32[8,128], index: 8, kind: output, shape index: {}]
  %s9 = sld [smem:[#allocation0]]
  $region62: #{tpu_custom_call.1} parent=0
    _
  %s11 = ssub.s32 1, %s9
  %s12 = scalar_select 0, %s11, %s9
  $region1: #{tpu_custom_call.1} parent=0
    #allocation2 [shape = 'u8[4096]{0}', space=vmem, size = 0x1000, scoped, tag = 'input window, operand 0, single buffered']
    #allocation3 [shape = 's32[1]{0}', space=sflag, size = 0x4, scoped, tag = 'scoped memory for tpu_custom_call.1']
    #allocation4 [shape = 's32[1]{0}', space=sflag, size = 0x4, scoped, tag = 'scoped memory for tpu_custom_call.1']
    #allocation5 [shape = 'u8[262144]{0}', space=vmem, size = 0x40000, scoped, tag = 'input window, operand 1, single buffered']
    #allocation6 [shape = 's32[1]{0}', space=sflag, size = 0x4, scoped, tag = 'scoped memory for tpu_custom_call.1']
    #allocation7 [shape = 'u8[2048]{0}', space=vmem, size = 0x800, scoped, tag = 'input window, operand 3, single buffered']
    #allocation8 [shape = 'u8[2048]{0}', space=vmem, size = 0x800, scoped, tag = 'input window, operand 4, single buffered']
    #allocation9 [shape = 's32[1]{0}', space=sflag, size = 0x4, scoped, tag = 'scoped memory for tpu_custom_call.1']
    #allocation10 [shape = 'u8[262144]{0}', space=vmem, size = 0x40000, scoped, tag = 'input window, operand 5, single buffered']
    #allocation11 [shape = 'u8[4096]{0}', space=vmem, size = 0x1000, scoped, tag = 'output window, operand 0, single buffered']
    %13 = vsyncpa [#allocation3], 0
    %14 = vsyncpa [#allocation6], 0
    %15 = vsyncpa [#allocation9], 0
    %16 = vsyncpa [#allocation4], 0
    // Predicated region
    $region2: #{tpu_custom_call.1} parent=1 // pred_check
      _
    $region3: #{tpu_custom_call.1} parent=1 // pred_check_branch
      %18 = sbr.rel (0) target = $region5
    $region4: #{tpu_custom_call.1} parent=1 // pred_region
      %s20 = ssub.s32 128, 128
      %21 = vsyncadd [#allocation3], %s20
      %s23 = sshll.u32 [#allocation2], 4
      %s24 = int_to_ptr.vmem [resolvable:$true] %s23
      %26 = dma.hbm_to_vmem [thread:$0]  %s0, 128, %s24, [#allocation3]
    $region5: #{tpu_custom_call.1} parent=1 // pred_fallthru
      _
    // Predicated region
    $region6: #{tpu_custom_call.1} parent=1 // pred_check
      _
    $region7: #{tpu_custom_call.1} parent=1 // pred_check_branch
      %28 = sbr.rel (0) target = $region9
    $region8: #{tpu_custom_call.1} parent=1 // pred_region
      %s30 = ssub.s32 8192, 8192
      %31 = vsyncadd [#allocation6], %s30
      %s32 = sshll.u32 [#allocation5], 4
      %s33 = int_to_ptr.vmem [resolvable:$true] %s32
      %38 = dma.hbm_to_vmem [thread:$0]  %s1, 8192, %s33, [#allocation6], 512, 512, 32
    $region9: #{tpu_custom_call.1} parent=1 // pred_fallthru
      _
    // Predicated region
    $region10: #{tpu_custom_call.1} parent=1 // pred_check
      _
    $region11: #{tpu_custom_call.1} parent=1 // pred_check_branch
      %40 = sbr.rel (0) target = $region13
    $region12: #{tpu_custom_call.1} parent=1 // pred_region
      _
    $region13: #{tpu_custom_call.1} parent=1 // pred_fallthru
      _
    // Predicated region
    $region14: #{tpu_custom_call.1} parent=1 // pred_check
      _
    $region15: #{tpu_custom_call.1} parent=1 // pred_check_branch
      %42 = sbr.rel (0) target = $region17
    $region16: #{tpu_custom_call.1} parent=1 // pred_region
      %s44 = ssub.s32 64, 64
      %45 = vsyncadd [#allocation6], %s44
      %s47 = sshll.u32 [#allocation7], 4
      %s48 = int_to_ptr.vmem [resolvable:$true] %s47
      %50 = dma.hbm_to_vmem [thread:$0]  %s3, 64, %s48, [#allocation6]
    $region17: #{tpu_custom_call.1} parent=1 // pred_fallthru
      _
    // Predicated region
    $region18: #{tpu_custom_call.1} parent=1 // pred_check
      _
    $region19: #{tpu_custom_call.1} parent=1 // pred_check_branch
      %52 = sbr.rel (0) target = $region21
    $region20: #{tpu_custom_call.1} parent=1 // pred_region
      %s54 = ssub.s32 64, 64
      %55 = vsyncadd [#allocation9], %s54
      %s57 = sshll.u32 [#allocation8], 4
      %s58 = int_to_ptr.vmem [resolvable:$true] %s57
      %60 = dma.hbm_to_vmem [thread:$0]  %s4, 64, %s58, [#allocation9]
    $region21: #{tpu_custom_call.1} parent=1 // pred_fallthru
      _
    // Predicated region
    $region22: #{tpu_custom_call.1} parent=1 // pred_check
      _
    $region23: #{tpu_custom_call.1} parent=1 // pred_check_branch
      %62 = sbr.rel (0) target = $region25
    $region24: #{tpu_custom_call.1} parent=1 // pred_region
      %s64 = ssub.s32 8192, 8192
      %65 = vsyncadd [#allocation9], %s64
      %s66 = sshll.u32 [#allocation10], 4
      %s67 = int_to_ptr.vmem [resolvable:$true] %s66
      %72 = dma.hbm_to_vmem [thread:$0]  %s5, 8192, %s67, [#allocation9], 128, 128, 8
    $region25: #{tpu_custom_call.1} parent=1 // pred_fallthru
      _
    // Predicated region
    $region26: #{tpu_custom_call.1} parent=1 // pred_check
      _
    $region27: #{tpu_custom_call.1} parent=1 // pred_check_branch
      %74 = sbr.rel (0) target = $region29
    $region28: #{tpu_custom_call.1} parent=1 // pred_region
      _
    $region29: #{tpu_custom_call.1} parent=1 // pred_fallthru
      _
    // Predicated region
    $region30: #{tpu_custom_call.1} parent=1 // pred_check
      _
    $region31: #{tpu_custom_call.1} parent=1 // pred_check_branch
      %76 = sbr.rel (0) target = $region33
    $region32: #{tpu_custom_call.1} parent=1 // pred_region
      _
    $region33: #{tpu_custom_call.1} parent=1 // pred_fallthru
      _
    // Predicated region
    $region34: #{tpu_custom_call.1} parent=1 // pred_check
      _
    $region35: #{tpu_custom_call.1} parent=1 // pred_check_branch
      %78 = sbr.rel (0) target = $region37
    $region36: #{tpu_custom_call.1} parent=1 // pred_region
      %79 = dma.done [#allocation3], 128
    $region37: #{tpu_custom_call.1} parent=1 // pred_fallthru
      _
    // Predicated region
    $region38: #{tpu_custom_call.1} parent=1 // pred_check
      _
    $region39: #{tpu_custom_call.1} parent=1 // pred_check_branch
      %81 = sbr.rel (0) target = $region41
    $region40: #{tpu_custom_call.1} parent=1 // pred_region
      %82 = dma.done [#allocation6], 8192
    $region41: #{tpu_custom_call.1} parent=1 // pred_fallthru
      _
    // Predicated region
    $region42: #{tpu_custom_call.1} parent=1 // pred_check
      _
    $region43: #{tpu_custom_call.1} parent=1 // pred_check_branch
      %84 = sbr.rel (0) target = $region45
    $region44: #{tpu_custom_call.1} parent=1 // pred_region
      %85 = dma.done [#allocation6], 64
    $region45: #{tpu_custom_call.1} parent=1 // pred_fallthru
      _
    // Predicated region
    $region46: #{tpu_custom_call.1} parent=1 // pred_check
      _
    $region47: #{tpu_custom_call.1} parent=1 // pred_check_branch
      %87 = sbr.rel (0) target = $region49
    $region48: #{tpu_custom_call.1} parent=1 // pred_region
      %88 = dma.done [#allocation9], 64
    $region49: #{tpu_custom_call.1} parent=1 // pred_fallthru
      _
    // Predicated region
    $region50: #{tpu_custom_call.1} parent=1 // pred_check
      _
    $region51: #{tpu_custom_call.1} parent=1 // pred_check_branch
      %90 = sbr.rel (0) target = $region53
    $region52: #{tpu_custom_call.1} parent=1 // pred_region
      %91 = dma.done [#allocation9], 8192
    $region53: #{tpu_custom_call.1} parent=1 // pred_fallthru
      _
    %v92 = vld [vmem:[#allocation2] sm:$0xff]
    %v93 = vld [vmem:[#allocation5] sm:$0xff]
    %v94 = vld [vmem:[#allocation5 + $0x8] sm:$0xff]
    %v95 = vld [vmem:[#allocation5 + $0x10] sm:$0xff]
    %v96 = vld [vmem:[#allocation5 + $0x18] sm:$0xff]
    %v97 = vld [vmem:[#allocation5 + $0x20] sm:$0xff]
    %v98 = vld [vmem:[#allocation5 + $0x28] sm:$0xff]
    %v99 = vld [vmem:[#allocation5 + $0x30] sm:$0xff]
    %v100 = vld [vmem:[#allocation5 + $0x38] sm:$0xff]
    %v101 = vld [vmem:[#allocation5 + $0x40] sm:$0xff]
    %v102 = vld [vmem:[#allocation5 + $0x48] sm:$0xff]
    %v103 = vld [vmem:[#allocation5 + $0x50] sm:$0xff]
    %v104 = vld [vmem:[#allocation5 + $0x58] sm:$0xff]
    %v105 = vld [vmem:[#allocation5 + $0x60] sm:$0xff]
    %v106 = vld [vmem:[#allocation5 + $0x68] sm:$0xff]
    %v107 = vld [vmem:[#allocation5 + $0x70] sm:$0xff]
    %v108 = vld [vmem:[#allocation5 + $0x78] sm:$0xff]
    %v109 = vld [vmem:[#allocation5 + $0x80] sm:$0xff]
    %v110 = vld [vmem:[#allocation5 + $0x88] sm:$0xff]
    %v111 = vld [vmem:[#allocation5 + $0x90] sm:$0xff]
    %v112 = vld [vmem:[#allocation5 + $0x98] sm:$0xff]
    %v113 = vld [vmem:[#allocation5 + $0xa0] sm:$0xff]
    %v114 = vld [vmem:[#allocation5 + $0xa8] sm:$0xff]
    %v115 = vld [vmem:[#allocation5 + $0xb0] sm:$0xff]
    %v116 = vld [vmem:[#allocation5 + $0xb8] sm:$0xff]
    %v117 = vld [vmem:[#allocation5 + $0xc0] sm:$0xff]
    %v118 = vld [vmem:[#allocation5 + $0xc8] sm:$0xff]
    %v119 = vld [vmem:[#allocation5 + $0xd0] sm:$0xff]
    %v120 = vld [vmem:[#allocation5 + $0xd8] sm:$0xff]
    %v121 = vld [vmem:[#allocation5 + $0xe0] sm:$0xff]
    %v122 = vld [vmem:[#allocation5 + $0xe8] sm:$0xff]
    %v123 = vld [vmem:[#allocation5 + $0xf0] sm:$0xff]
    %v124 = vld [vmem:[#allocation5 + $0xf8] sm:$0xff]
    %v125 = vld [vmem:[#allocation5 + $0x100] sm:$0xff]
    %v126 = vld [vmem:[#allocation5 + $0x108] sm:$0xff]
    %v127 = vld [vmem:[#allocation5 + $0x110] sm:$0xff]
    %v128 = vld [vmem:[#allocation5 + $0x118] sm:$0xff]
    %v129 = vld [vmem:[#allocation5 + $0x120] sm:$0xff]
    %v130 = vld [vmem:[#allocation5 + $0x128] sm:$0xff]
    %v131 = vld [vmem:[#allocation5 + $0x130] sm:$0xff]
    %v132 = vld [vmem:[#allocation5 + $0x138] sm:$0xff]
    %v133 = vld [vmem:[#allocation5 + $0x140] sm:$0xff]
    %v134 = vld [vmem:[#allocation5 + $0x148] sm:$0xff]
    %v135 = vld [vmem:[#allocation5 + $0x150] sm:$0xff]
    %v136 = vld [vmem:[#allocation5 + $0x158] sm:$0xff]
    %v137 = vld [vmem:[#allocation5 + $0x160] sm:$0xff]
    %v138 = vld [vmem:[#allocation5 + $0x168] sm:$0xff]
    %v139 = vld [vmem:[#allocation5 + $0x170] sm:$0xff]
    %v140 = vld [vmem:[#allocation5 + $0x178] sm:$0xff]
    %v141 = vld [vmem:[#allocation5 + $0x180] sm:$0xff]
    %v142 = vld [vmem:[#allocation5 + $0x188] sm:$0xff]
    %v143 = vld [vmem:[#allocation5 + $0x190] sm:$0xff]
    %v144 = vld [vmem:[#allocation5 + $0x198] sm:$0xff]
    %v145 = vld [vmem:[#allocation5 + $0x1a0] sm:$0xff]
    %v146 = vld [vmem:[#allocation5 + $0x1a8] sm:$0xff]
    %v147 = vld [vmem:[#allocation5 + $0x1b0] sm:$0xff]
    %v148 = vld [vmem:[#allocation5 + $0x1b8] sm:$0xff]
    %v149 = vld [vmem:[#allocation5 + $0x1c0] sm:$0xff]
    %v150 = vld [vmem:[#allocation5 + $0x1c8] sm:$0xff]
    %v151 = vld [vmem:[#allocation5 + $0x1d0] sm:$0xff]
    %v152 = vld [vmem:[#allocation5 + $0x1d8] sm:$0xff]
    %v153 = vld [vmem:[#allocation5 + $0x1e0] sm:$0xff]
    %v154 = vld [vmem:[#allocation5 + $0x1e8] sm:$0xff]
    %v155 = vld [vmem:[#allocation5 + $0x1f0] sm:$0xff]
    %v156 = vld [vmem:[#allocation5 + $0x1f8] sm:$0xff]
    %v157 = vld [vmem:[%s2] sm:$0xf]
    %v159 = vlaneseq
    %v160 = vshrl.u32 %v159, 7
    %v161 = vsub.s32 0, %v160
    %v162 = vrot.slane %v157, %v161
    %v163 = vlaneseq
    %v164 = vshrl.u32 %v163, 7
    %v165 = vsub.s32 1, %v164
    %v166 = vrot.slane %v157, %v165
    %v167 = vlaneseq
    %v168 = vshrl.u32 %v167, 7
    %v169 = vsub.s32 2, %v168
    %v170 = vrot.slane %v157, %v169
    %v171 = vlaneseq
    %v172 = vshrl.u32 %v171, 7
    %v173 = vsub.s32 3, %v172
    %v174 = vrot.slane %v157, %v173
    %179 = vmatprep.subr.mxu0 %v94
    %180 = vmatpush1.msra.mxu0 %v93
    %181 = vmatprep.subr.mxu0 %v98
    %182 = vmatpush1.msra.mxu0 %v97
    %183 = vmatprep.subr.mxu0 %v102
    %184 = vmatpush1.msra.mxu0 %v101
    %185 = vmatprep.subr.mxu0 %v106
    %186 = vmatpush1.msra.mxu0 %v105
    %187 = vmatprep.subr.mxu0 %v110
    %188 = vmatpush1.msra.mxu0 %v109
    %189 = vmatprep.subr.mxu0 %v114
    %190 = vmatpush1.msra.mxu0 %v113
    %191 = vmatprep.subr.mxu0 %v118
    %192 = vmatpush1.msra.mxu0 %v117
    %193 = vmatprep.subr.mxu0 %v122
    %194 = vmatpush1.msra.mxu0 %v121
    %195 = vmatprep.subr.mxu0 %v126
    %196 = vmatpush1.msra.mxu0 %v125
    %197 = vmatprep.subr.mxu0 %v130
    %198 = vmatpush1.msra.mxu0 %v129
    %199 = vmatprep.subr.mxu0 %v134
    %200 = vmatpush1.msra.mxu0 %v133
    %201 = vmatprep.subr.mxu0 %v138
    %202 = vmatpush1.msra.mxu0 %v137
    %203 = vmatprep.subr.mxu0 %v142
    %204 = vmatpush1.msra.mxu0 %v141
    %205 = vmatprep.subr.mxu0 %v146
    %206 = vmatpush1.msra.mxu0 %v145
    %207 = vmatprep.subr.mxu0 %v150
    %208 = vmatpush1.msra.mxu0 %v149
    %209 = vmatprep.subr.mxu0 %v154
    %210 = vmatpush1.msra.mxu0 %v153
    %211 = vmatprep.subr.mxu0 0.0
    %212 = vmatpush1.msra.mxu0 0.0
    %213 = vmatprep.subr.mxu0 0.0
    %214 = vmatpush1.msra.mxu0 0.0
    %215 = vmatprep.subr.mxu0 0.0
    %216 = vmatpush1.msra.mxu0 0.0
    %217 = vmatprep.subr.mxu0 0.0
    %218 = vmatpush1.msra.mxu0 0.0
    %219 = vmatprep.subr.mxu0 0.0
    %220 = vmatpush1.msra.mxu0 0.0
    %221 = vmatprep.subr.mxu0 0.0
    %222 = vmatpush1.msra.mxu0 0.0
    %223 = vmatprep.subr.mxu0 0.0
    %224 = vmatpush1.msra.mxu0 0.0
    %225 = vmatprep.subr.mxu0 0.0
    %226 = vmatpush1.msra.mxu0 0.0
    %227 = vmatprep.subr.mxu0 0.0
    %228 = vmatpush1.msra.mxu0 0.0
    %229 = vmatprep.subr.mxu0 0.0
    %230 = vmatpush1.msra.mxu0 0.0
    %231 = vmatprep.subr.mxu0 0.0
    %232 = vmatpush1.msra.mxu0 0.0
    %233 = vmatprep.subr.mxu0 0.0
    %234 = vmatpush1.msra.mxu0 0.0
    %235 = vmatprep.subr.mxu0 0.0
    %236 = vmatpush1.msra.mxu0 0.0
    %237 = vmatprep.subr.mxu0 0.0
    %238 = vmatpush1.msra.mxu0 0.0
    %239 = vmatprep.subr.mxu0 0.0
    %240 = vmatpush1.msra.mxu0 0.0
    %241 = vmatprep.subr.mxu0 0.0
    %242 = vmatpush1.msra.mxu0 0.0
    %243 = vmatprep.mubr.f32.mxu0 0.0
    %244 = vmatmul.mubr.f32.gmra.mrb[0].mxu0 %v92
    %v245 = vpop.f32.mrb[0].mxu0
    %v246 = vadd.f32 %v162, %v245
    %v247 = vpop.f32.mrb[0].mxu0
    %v248 = vadd.f32 %v166, %v247
    %249 = vdwg.mxu0
    %250 = vmatprep.subr.mxu0 %v96
    %251 = vmatpush1.msra.mxu0 %v95
    %252 = vmatprep.subr.mxu0 %v100
    %253 = vmatpush1.msra.mxu0 %v99
    %254 = vmatprep.subr.mxu0 %v104
    %255 = vmatpush1.msra.mxu0 %v103
    %256 = vmatprep.subr.mxu0 %v108
    %257 = vmatpush1.msra.mxu0 %v107
    %258 = vmatprep.subr.mxu0 %v112
    %259 = vmatpush1.msra.mxu0 %v111
    %260 = vmatprep.subr.mxu0 %v116
    %261 = vmatpush1.msra.mxu0 %v115
    %262 = vmatprep.subr.mxu0 %v120
    %263 = vmatpush1.msra.mxu0 %v119
    %264 = vmatprep.subr.mxu0 %v124
    %265 = vmatpush1.msra.mxu0 %v123
    %266 = vmatprep.subr.mxu0 %v128
    %267 = vmatpush1.msra.mxu0 %v127
    %268 = vmatprep.subr.mxu0 %v132
    %269 = vmatpush1.msra.mxu0 %v131
    %270 = vmatprep.subr.mxu0 %v136
    %271 = vmatpush1.msra.mxu0 %v135
    %272 = vmatprep.subr.mxu0 %v140
    %273 = vmatpush1.msra.mxu0 %v139
    %274 = vmatprep.subr.mxu0 %v144
    %275 = vmatpush1.msra.mxu0 %v143
    %276 = vmatprep.subr.mxu0 %v148
    %277 = vmatpush1.msra.mxu0 %v147
    %278 = vmatprep.subr.mxu0 %v152
    %279 = vmatpush1.msra.mxu0 %v151
    %280 = vmatprep.subr.mxu0 %v156
    %281 = vmatpush1.msra.mxu0 %v155
    %282 = vmatprep.subr.mxu0 0.0
    %283 = vmatpush1.msra.mxu0 0.0
    %284 = vmatprep.subr.mxu0 0.0
    %285 = vmatpush1.msra.mxu0 0.0
    %286 = vmatprep.subr.mxu0 0.0
    %287 = vmatpush1.msra.mxu0 0.0
    %288 = vmatprep.subr.mxu0 0.0
    %289 = vmatpush1.msra.mxu0 0.0
    %290 = vmatprep.subr.mxu0 0.0
    %291 = vmatpush1.msra.mxu0 0.0
    %292 = vmatprep.subr.mxu0 0.0
    %293 = vmatpush1.msra.mxu0 0.0
    %294 = vmatprep.subr.mxu0 0.0
    %295 = vmatpush1.msra.mxu0 0.0
    %296 = vmatprep.subr.mxu0 0.0
    %297 = vmatpush1.msra.mxu0 0.0
    %298 = vmatprep.subr.mxu0 0.0
    %299 = vmatpush1.msra.mxu0 0.0
    %300 = vmatprep.subr.mxu0 0.0
    %301 = vmatpush1.msra.mxu0 0.0
    %302 = vmatprep.subr.mxu0 0.0
    %303 = vmatpush1.msra.mxu0 0.0
    %304 = vmatprep.subr.mxu0 0.0
    %305 = vmatpush1.msra.mxu0 0.0
    %306 = vmatprep.subr.mxu0 0.0
    %307 = vmatpush1.msra.mxu0 0.0
    %308 = vmatprep.subr.mxu0 0.0
    %309 = vmatpush1.msra.mxu0 0.0
    %310 = vmatprep.subr.mxu0 0.0
    %311 = vmatpush1.msra.mxu0 0.0
    %312 = vmatprep.subr.mxu0 0.0
    %313 = vmatpush1.msra.mxu0 0.0
    %314 = vmatprep.mubr.f32.mxu0 0.0
    %315 = vmatmul.mubr.f32.gmra.mrb[0].mxu0 %v92
    %v316 = vpop.f32.mrb[0].mxu0
    %v317 = vadd.f32 %v170, %v316
    %v318 = vpop.f32.mrb[0].mxu0
    %v319 = vadd.f32 %v174, %v318
    %320 = vdwg.mxu0
    %v321 = vadd.f32 %v246, %v248
    %v322 = vadd.f32 %v321, %v317
    %v323 = vadd.f32 %v322, %v319
    %324 = vadd.xlane.f32.xlu0 %v323
    %v325 = vpop.xlane.xlu0 %324
    %v326 = vrcp.pop 512.0
    %v327 = vmul.f32 %v325, %v326
    %v328 = vsub.f32 %v246, %v327
    %v329 = vsub.f32 %v248, %v327
    %v330 = vsub.f32 %v317, %v327
    %v331 = vsub.f32 %v319, %v327
    %v332 = vmul.f32 %v328, %v328
    %v333 = vmul.f32 %v329, %v329
    %v334 = vmul.f32 %v330, %v330
    %v335 = vmul.f32 %v331, %v331
    %v336 = vadd.f32 %v332, %v333
    %v337 = vadd.f32 %v336, %v334
    %v338 = vadd.f32 %v337, %v335
    %339 = vadd.xlane.f32.xlu0 %v338
    %v340 = vpop.xlane.xlu0 %339
    %v341 = vmul.f32 %v340, %v326
    %v342 = vadd.f32 %v341, 1e-05
    %v343 = vrsqrt.pop %v342
    %v344 = vmul.f32 %v328, %v343
    %v345 = vmul.f32 %v329, %v343
    %v346 = vmul.f32 %v330, %v343
    %v347 = vmul.f32 %v331, %v343
    %v348 = vld [vmem:[#allocation7] sm:$0xf]
    %v350 = vlaneseq
    %v351 = vshrl.u32 %v350, 7
    %v352 = vsub.s32 0, %v351
    %v353 = vrot.slane %v348, %v352
    %v354 = vlaneseq
    %v355 = vshrl.u32 %v354, 7
    %v356 = vsub.s32 1, %v355
    %v357 = vrot.slane %v348, %v356
    %v358 = vlaneseq
    %v359 = vshrl.u32 %v358, 7
    %v360 = vsub.s32 2, %v359
    %v361 = vrot.slane %v348, %v360
    %v362 = vlaneseq
    %v363 = vshrl.u32 %v362, 7
    %v364 = vsub.s32 3, %v363
    %v365 = vrot.slane %v348, %v364
    %v370 = vmul.f32 %v344, %v353
    %v371 = vmul.f32 %v345, %v357
    %v372 = vmul.f32 %v346, %v361
    %v373 = vmul.f32 %v347, %v365
    %v374 = vld [vmem:[#allocation8] sm:$0xf]
    %v376 = vlaneseq
    %v377 = vshrl.u32 %v376, 7
    %v378 = vsub.s32 0, %v377
    %v379 = vrot.slane %v374, %v378
    %v380 = vlaneseq
    %v381 = vshrl.u32 %v380, 7
    %v382 = vsub.s32 1, %v381
    %v383 = vrot.slane %v374, %v382
    %v384 = vlaneseq
    %v385 = vshrl.u32 %v384, 7
    %v386 = vsub.s32 2, %v385
    %v387 = vrot.slane %v374, %v386
    %v388 = vlaneseq
    %v389 = vshrl.u32 %v388, 7
    %v390 = vsub.s32 3, %v389
    %v391 = vrot.slane %v374, %v390
    %v396 = vadd.f32 %v370, %v379
    %v397 = vadd.f32 %v371, %v383
    %v398 = vadd.f32 %v372, %v387
    %v399 = vadd.f32 %v373, %v391
    %v400 = vmul.f32 %v396, 0.5
    %v401 = vmul.f32 %v397, 0.5
    %v402 = vmul.f32 %v398, 0.5
    %v403 = vmul.f32 %v399, 0.5
    %v404 = vmul.f32 %v396, 0.70710677
    %v405 = vmul.f32 %v397, 0.70710677
    %v406 = vmul.f32 %v398, 0.70710677
    %v407 = vmul.f32 %v399, 0.70710677
    %v408 = verf.f32.pop %v404
    %v409 = verf.f32.pop %v405
    %v410 = verf.f32.pop %v406
    %v411 = verf.f32.pop %v407
    %v412 = vadd.f32 %v408, 1.0
    %v413 = vadd.f32 %v409, 1.0
    %v414 = vadd.f32 %v410, 1.0
    %v415 = vadd.f32 %v411, 1.0
    %v416 = vmul.f32 %v400, %v412
    %v417 = vmul.f32 %v401, %v413
    %v418 = vmul.f32 %v402, %v414
    %v419 = vmul.f32 %v403, %v415
    %v420 = vld [vmem:[#allocation10] sm:$0xff]
    %v421 = vld [vmem:[#allocation10 + $0x8] sm:$0xff]
    %v422 = vld [vmem:[#allocation10 + $0x10] sm:$0xff]
    %v423 = vld [vmem:[#allocation10 + $0x18] sm:$0xff]
    %v424 = vld [vmem:[#allocation10 + $0x20] sm:$0xff]
    %v425 = vld [vmem:[#allocation10 + $0x28] sm:$0xff]
    %v426 = vld [vmem:[#allocation10 + $0x30] sm:$0xff]
    %v427 = vld [vmem:[#allocation10 + $0x38] sm:$0xff]
    %v428 = vld [vmem:[#allocation10 + $0x40] sm:$0xff]
    %v429 = vld [vmem:[#allocation10 + $0x48] sm:$0xff]
    %v430 = vld [vmem:[#allocation10 + $0x50] sm:$0xff]
    %v431 = vld [vmem:[#allocation10 + $0x58] sm:$0xff]
    %v432 = vld [vmem:[#allocation10 + $0x60] sm:$0xff]
    %v433 = vld [vmem:[#allocation10 + $0x68] sm:$0xff]
    %v434 = vld [vmem:[#allocation10 + $0x70] sm:$0xff]
    %v435 = vld [vmem:[#allocation10 + $0x78] sm:$0xff]
    %v436 = vld [vmem:[#allocation10 + $0x80] sm:$0xff]
    %v437 = vld [vmem:[#allocation10 + $0x88] sm:$0xff]
    %v438 = vld [vmem:[#allocation10 + $0x90] sm:$0xff]
    %v439 = vld [vmem:[#allocation10 + $0x98] sm:$0xff]
    %v440 = vld [vmem:[#allocation10 + $0xa0] sm:$0xff]
    %v441 = vld [vmem:[#allocation10 + $0xa8] sm:$0xff]
    %v442 = vld [vmem:[#allocation10 + $0xb0] sm:$0xff]
    %v443 = vld [vmem:[#allocation10 + $0xb8] sm:$0xff]
    %v444 = vld [vmem:[#allocation10 + $0xc0] sm:$0xff]
    %v445 = vld [vmem:[#allocation10 + $0xc8] sm:$0xff]
    %v446 = vld [vmem:[#allocation10 + $0xd0] sm:$0xff]
    %v447 = vld [vmem:[#allocation10 + $0xd8] sm:$0xff]
    %v448 = vld [vmem:[#allocation10 + $0xe0] sm:$0xff]
    %v449 = vld [vmem:[#allocation10 + $0xe8] sm:$0xff]
    %v450 = vld [vmem:[#allocation10 + $0xf0] sm:$0xff]
    %v451 = vld [vmem:[#allocation10 + $0xf8] sm:$0xff]
    %v452 = vld [vmem:[#allocation10 + $0x100] sm:$0xff]
    %v453 = vld [vmem:[#allocation10 + $0x108] sm:$0xff]
    %v454 = vld [vmem:[#allocation10 + $0x110] sm:$0xff]
    %v455 = vld [vmem:[#allocation10 + $0x118] sm:$0xff]
    %v456 = vld [vmem:[#allocation10 + $0x120] sm:$0xff]
    %v457 = vld [vmem:[#allocation10 + $0x128] sm:$0xff]
    %v458 = vld [vmem:[#allocation10 + $0x130] sm:$0xff]
    %v459 = vld [vmem:[#allocation10 + $0x138] sm:$0xff]
    %v460 = vld [vmem:[#allocation10 + $0x140] sm:$0xff]
    %v461 = vld [vmem:[#allocation10 + $0x148] sm:$0xff]
    %v462 = vld [vmem:[#allocation10 + $0x150] sm:$0xff]
    %v463 = vld [vmem:[#allocation10 + $0x158] sm:$0xff]
    %v464 = vld [vmem:[#allocation10 + $0x160] sm:$0xff]
    %v465 = vld [vmem:[#allocation10 + $0x168] sm:$0xff]
    %v466 = vld [vmem:[#allocation10 + $0x170] sm:$0xff]
    %v467 = vld [vmem:[#allocation10 + $0x178] sm:$0xff]
    %v468 = vld [vmem:[#allocation10 + $0x180] sm:$0xff]
    %v469 = vld [vmem:[#allocation10 + $0x188] sm:$0xff]
    %v470 = vld [vmem:[#allocation10 + $0x190] sm:$0xff]
    %v471 = vld [vmem:[#allocation10 + $0x198] sm:$0xff]
    %v472 = vld [vmem:[#allocation10 + $0x1a0] sm:$0xff]
    %v473 = vld [vmem:[#allocation10 + $0x1a8] sm:$0xff]
    %v474 = vld [vmem:[#allocation10 + $0x1b0] sm:$0xff]
    %v475 = vld [vmem:[#allocation10 + $0x1b8] sm:$0xff]
    %v476 = vld [vmem:[#allocation10 + $0x1c0] sm:$0xff]
    %v477 = vld [vmem:[#allocation10 + $0x1c8] sm:$0xff]
    %v478 = vld [vmem:[#allocation10 + $0x1d0] sm:$0xff]
    %v479 = vld [vmem:[#allocation10 + $0x1d8] sm:$0xff]
    %v480 = vld [vmem:[#allocation10 + $0x1e0] sm:$0xff]
    %v481 = vld [vmem:[#allocation10 + $0x1e8] sm:$0xff]
    %v482 = vld [vmem:[#allocation10 + $0x1f0] sm:$0xff]
    %v483 = vld [vmem:[#allocation10 + $0x1f8] sm:$0xff]
    %v484 = vld [vmem:[%s6] sm:$0x1]
    %v486 = vlaneseq
    %v487 = vshrl.u32 %v486, 7
    %v488 = vsub.s32 0, %v487
    %v489 = vrot.slane %v484, %v488
    %491 = vmatprep.subr.mxu0 0.0
    %492 = vmatpush1.msra.mxu0 %v420
    %493 = vmatprep.subr.mxu0 0.0
    %494 = vmatpush1.msra.mxu0 %v421
    %495 = vmatprep.subr.mxu0 0.0
    %496 = vmatpush1.msra.mxu0 %v422
    %497 = vmatprep.subr.mxu0 0.0
    %498 = vmatpush1.msra.mxu0 %v423
    %499 = vmatprep.subr.mxu0 0.0
    %500 = vmatpush1.msra.mxu0 %v424
    %501 = vmatprep.subr.mxu0 0.0
    %502 = vmatpush1.msra.mxu0 %v425
    %503 = vmatprep.subr.mxu0 0.0
    %504 = vmatpush1.msra.mxu0 %v426
    %505 = vmatprep.subr.mxu0 0.0
    %506 = vmatpush1.msra.mxu0 %v427
    %507 = vmatprep.subr.mxu0 0.0
    %508 = vmatpush1.msra.mxu0 %v428
    %509 = vmatprep.subr.mxu0 0.0
    %510 = vmatpush1.msra.mxu0 %v429
    %511 = vmatprep.subr.mxu0 0.0
    %512 = vmatpush1.msra.mxu0 %v430
    %513 = vmatprep.subr.mxu0 0.0
    %514 = vmatpush1.msra.mxu0 %v431
    %515 = vmatprep.subr.mxu0 0.0
    %516 = vmatpush1.msra.mxu0 %v432
    %517 = vmatprep.subr.mxu0 0.0
    %518 = vmatpush1.msra.mxu0 %v433
    %519 = vmatprep.subr.mxu0 0.0
    %520 = vmatpush1.msra.mxu0 %v434
    %521 = vmatprep.subr.mxu0 0.0
    %522 = vmatpush1.msra.mxu0 %v435
    %523 = vmatprep.subr.mxu0 0.0
    %524 = vmatpush1.msra.mxu0 %v436
    %525 = vmatprep.subr.mxu0 0.0
    %526 = vmatpush1.msra.mxu0 %v437
    %527 = vmatprep.subr.mxu0 0.0
    %528 = vmatpush1.msra.mxu0 %v438
    %529 = vmatprep.subr.mxu0 0.0
    %530 = vmatpush1.msra.mxu0 %v439
    %531 = vmatprep.subr.mxu0 0.0
    %532 = vmatpush1.msra.mxu0 %v440
    %533 = vmatprep.subr.mxu0 0.0
    %534 = vmatpush1.msra.mxu0 %v441
    %535 = vmatprep.subr.mxu0 0.0
    %536 = vmatpush1.msra.mxu0 %v442
    %537 = vmatprep.subr.mxu0 0.0
    %538 = vmatpush1.msra.mxu0 %v443
    %539 = vmatprep.subr.mxu0 0.0
    %540 = vmatpush1.msra.mxu0 %v444
    %541 = vmatprep.subr.mxu0 0.0
    %542 = vmatpush1.msra.mxu0 %v445
    %543 = vmatprep.subr.mxu0 0.0
    %544 = vmatpush1.msra.mxu0 %v446
    %545 = vmatprep.subr.mxu0 0.0
    %546 = vmatpush1.msra.mxu0 %v447
    %547 = vmatprep.subr.mxu0 0.0
    %548 = vmatpush1.msra.mxu0 %v448
    %549 = vmatprep.subr.mxu0 0.0
    %550 = vmatpush1.msra.mxu0 %v449
    %551 = vmatprep.subr.mxu0 0.0
    %552 = vmatpush1.msra.mxu0 %v450
    %553 = vmatprep.subr.mxu0 0.0
    %554 = vmatpush1.msra.mxu0 %v451
    %555 = vmatprep.mubr.f32.mxu0 %v417
    %556 = vmatmul.mubr.f32.gmra.mrb[0].mxu0 %v416
    %v557 = vpop.f32.mrb[0].mxu0
    %v558 = vadd.f32 %v489, %v557
    %v559 = vpop.f32.mrb[0].mxu0
    %560 = vdwg.mxu0
    %561 = vmatprep.subr.mxu0 0.0
    %562 = vmatpush1.msra.mxu0 %v452
    %563 = vmatprep.subr.mxu0 0.0
    %564 = vmatpush1.msra.mxu0 %v453
    %565 = vmatprep.subr.mxu0 0.0
    %566 = vmatpush1.msra.mxu0 %v454
    %567 = vmatprep.subr.mxu0 0.0
    %568 = vmatpush1.msra.mxu0 %v455
    %569 = vmatprep.subr.mxu0 0.0
    %570 = vmatpush1.msra.mxu0 %v456
    %571 = vmatprep.subr.mxu0 0.0
    %572 = vmatpush1.msra.mxu0 %v457
    %573 = vmatprep.subr.mxu0 0.0
    %574 = vmatpush1.msra.mxu0 %v458
    %575 = vmatprep.subr.mxu0 0.0
    %576 = vmatpush1.msra.mxu0 %v459
    %577 = vmatprep.subr.mxu0 0.0
    %578 = vmatpush1.msra.mxu0 %v460
    %579 = vmatprep.subr.mxu0 0.0
    %580 = vmatpush1.msra.mxu0 %v461
    %581 = vmatprep.subr.mxu0 0.0
    %582 = vmatpush1.msra.mxu0 %v462
    %583 = vmatprep.subr.mxu0 0.0
    %584 = vmatpush1.msra.mxu0 %v463
    %585 = vmatprep.subr.mxu0 0.0
    %586 = vmatpush1.msra.mxu0 %v464
    %587 = vmatprep.subr.mxu0 0.0
    %588 = vmatpush1.msra.mxu0 %v465
    %589 = vmatprep.subr.mxu0 0.0
    %590 = vmatpush1.msra.mxu0 %v466
    %591 = vmatprep.subr.mxu0 0.0
    %592 = vmatpush1.msra.mxu0 %v467
    %593 = vmatprep.subr.mxu0 0.0
    %594 = vmatpush1.msra.mxu0 %v468
    %595 = vmatprep.subr.mxu0 0.0
    %596 = vmatpush1.msra.mxu0 %v469
    %597 = vmatprep.subr.mxu0 0.0
    %598 = vmatpush1.msra.mxu0 %v470
    %599 = vmatprep.subr.mxu0 0.0
    %600 = vmatpush1.msra.mxu0 %v471
    %601 = vmatprep.subr.mxu0 0.0
    %602 = vmatpush1.msra.mxu0 %v472
    %603 = vmatprep.subr.mxu0 0.0
    %604 = vmatpush1.msra.mxu0 %v473
    %605 = vmatprep.subr.mxu0 0.0
    %606 = vmatpush1.msra.mxu0 %v474
    %607 = vmatprep.subr.mxu0 0.0
    %608 = vmatpush1.msra.mxu0 %v475
    %609 = vmatprep.subr.mxu0 0.0
    %610 = vmatpush1.msra.mxu0 %v476
    %611 = vmatprep.subr.mxu0 0.0
    %612 = vmatpush1.msra.mxu0 %v477
    %613 = vmatprep.subr.mxu0 0.0
    %614 = vmatpush1.msra.mxu0 %v478
    %615 = vmatprep.subr.mxu0 0.0
    %616 = vmatpush1.msra.mxu0 %v479
    %617 = vmatprep.subr.mxu0 0.0
    %618 = vmatpush1.msra.mxu0 %v480
    %619 = vmatprep.subr.mxu0 0.0
    %620 = vmatpush1.msra.mxu0 %v481
    %621 = vmatprep.subr.mxu0 0.0
    %622 = vmatpush1.msra.mxu0 %v482
    %623 = vmatprep.subr.mxu0 0.0
    %624 = vmatpush1.msra.mxu0 %v483
    %625 = vmatprep.mubr.f32.mxu0 %v419
    %626 = vmatmul.mubr.f32.gmra.mrb[0].mxu0 %v418
    %v627 = vpop.f32.mrb[0].mxu0
    %v628 = vadd.f32 %v558, %v627
    %v629 = vpop.f32.mrb[0].mxu0
    %630 = vdwg.mxu0
    %v631 = vld [vmem:[%s7] sm:$0xff]
    %v632 = vmul.f32 %v628, %v631
    %633 = vst [vmem:[#allocation11] sm:$0xff] %v632
    // Predicated region
    $region54: #{tpu_custom_call.1} parent=1 // pred_check
      _
    $region55: #{tpu_custom_call.1} parent=1 // pred_check_branch
      %635 = sbr.rel (0) target = $region57
    $region56: #{tpu_custom_call.1} parent=1 // pred_region
      %s637 = ssub.s32 128, 128
      %638 = vsyncadd [#allocation4], %s637
      %s640 = sshll.u32 [#allocation11], 4
      %s641 = int_to_ptr.vmem [resolvable:$true] %s640
      %643 = dma.vmem_to_hbm [thread:$0]  %s641, 128, %s8, [#allocation4]
    $region57: #{tpu_custom_call.1} parent=1 // pred_fallthru
      _
    // Predicated region
    $region58: #{tpu_custom_call.1} parent=1 // pred_check
      _
    $region59: #{tpu_custom_call.1} parent=1 // pred_check_branch
      %645 = sbr.rel (0) target = $region61
    $region60: #{tpu_custom_call.1} parent=1 // pred_region
      %646 = dma.done [#allocation4], 128
    $region61: #{tpu_custom_call.1} parent=1 // pred_fallthru
      _
    %647 = vsyncpa [#allocation3], 1
    %648 = vsyncpa [#allocation6], 1
    %649 = vsyncpa [#allocation9], 1
    %650 = vsyncpa [#allocation4], 1

</llo_original>
